<compile_context>
chip_gen: v7x
topology: tpu7x:2x2x1
jax: 0.10.0
libtpu: 0.0.40
codegen_flags: <defaults>
</compile_context>

<pallas_src>
import jax
import jax.numpy as jnp
from jax.experimental import pallas as pl
from jax.experimental.pallas import tpu as pltpu

LANE = 128
SUBLANE = 8
# Conservative pipeline budget so we stay under v5e's 16 MiB scoped-VMEM default
# without needing vmem_limit_bytes overrides (v6e/v7x default to 32 MiB scoped).
_VMEM_BUDGET_BYTES = 12 * 1024 * 1024


def _round_up(n, m):
    return ((n + m - 1) // m) * m


def _linear_mean_kernel(x_ref, wt_ref, b_ref, mean_ref):
    # mean = x @ W^T + b : bf16 x / bf16 W on the MXU, f32 accumulate,
    # lane-dense 128-wide unmasked store.
    mean = jnp.dot(x_ref[...], wt_ref[...], preferred_element_type=jnp.float32)
    mean_ref[...] = mean + b_ref[...]


def make_diag_gaussian_params(weight, bias, logstd):
    """One-time parameter preprocessing (at init / after each optimizer step).

    weight: (Dout, Din) in PyTorch layout; bias, logstd: (Dout,).
    Pre-transposes + lane-pads the weight to a (Din, 128k) bf16 block,
    lane-pads the bias (f32), and precomputes std = exp(logstd) as (1, Dout).
    """
    num_outputs, num_inputs = weight.shape
    d_pad = max(LANE, _round_up(num_outputs, LANE))
    # Note: Din stays unpadded. A block equal to the full array dim is a legal
    # TPU layout, and padding Din here would force a matching pad pass on x in
    # the wrapper (an extra HBM pass). If the upstream producer already emits
    # sublane-padded activations, pad Din here instead (zero runtime cost).
    w_t = jnp.zeros((num_inputs, d_pad), jnp.bfloat16).at[:, :num_outputs].set(
        weight.T.astype(jnp.bfloat16))
    b = jnp.zeros((1, d_pad), jnp.float32).at[:, :num_outputs].set(
        bias.astype(jnp.float32))
    std = jnp.exp(logstd.astype(jnp.float32)).reshape(1, num_outputs)
    return {"w_t": w_t, "b": b, "std": std, "num_outputs": num_outputs}


def _pick_block_b(B, Din, d_pad, block_b, x_itemsize):
    """Batch-tile rows: >=2 tiles for big batches (v7x 2-TC), VMEM-budget capped."""
    if B <= 2 * SUBLANE:
        bb = _round_up(max(B, 1), SUBLANE)
    else:
        # Guarantee at least 2 grid tiles so both v7x TensorCores get work.
        bb = min(block_b, _round_up(pl.cdiv(B, 2), SUBLANE))
    bb = _round_up(max(bb, SUBLANE), SUBLANE)
    # VMEM: x tile (2 buffers) + f32 out tile (2 buffers) per row, plus the
    # single-buffered resident weight/bias. Cap bb to fit the budget.
    resident = Din * d_pad * 2 + d_pad * 4            # bf16 w_t + f32 bias, 1 buffer each
    per_row = 2 * Din * x_itemsize + 2 * d_pad * 4    # x (2 bufs) + out (2 bufs)
    max_rows = max(SUBLANE, (_VMEM_BUDGET_BYTES - resident) // per_row)
    bb = min(bb, (max_rows // SUBLANE) * SUBLANE)
    return max(SUBLANE, bb)


def diag_gaussian(x, params, *, block_b=1024):
    """PPO DiagGaussian head.

    x: (B, Din); supply bf16 straight from the producer to halve the HBM read.
    Returns:
      mean_padded: (B, d_pad) float32, lane-padded to a multiple of 128.
        Slice [:, :params["num_outputs"]] at the point of use so it fuses with
        the consumer (log-prob / sampling) instead of costing an HBM pass here.
      std: (1, num_outputs) float32 vector (exp(logstd)); broadcast lazily in
        the consumer's jit.
    """
    B, Din = x.shape
    w_t, b = params["w_t"], params["b"]
    d_pad = w_t.shape[1]
    assert w_t.shape[0] == Din, "x feature dim must match the prepared weight"

    bb = _pick_block_b(B, Din, d_pad, block_b, x.dtype.itemsize)
    grid = (pl.cdiv(B, bb),)

    mean_padded = pl.pallas_call(
        _linear_mean_kernel,
        out_shape=jax.ShapeDtypeStruct((B, d_pad), jnp.float32),
        grid_spec=pltpu.PrefetchScalarGridSpec(
            num_scalar_prefetch=0,
            grid=grid,
            in_specs=[
                # Batch-tiled activations (ragged last tile clipped by Pallas).
                pl.BlockSpec((bb, Din), lambda i: (i, 0)),
                # Grid-invariant operands: resident in VMEM, single-buffered.
                pl.BlockSpec((Din, d_pad), lambda i: (0, 0),
                             pipeline_mode=pl.Buffered(1)),
                pl.BlockSpec((1, d_pad), lambda i: (0, 0),
                             pipeline_mode=pl.Buffered(1)),
            ],
            out_specs=pl.BlockSpec((bb, d_pad), lambda i: (i, 0)),
        ),
        compiler_params=pltpu.CompilerParams(
            dimension_semantics=("parallel",),  # split batch tiles across TCs (v7x)
        ),
    )(x, w_t, b)

    # TODO(synk): the FixedNormal distribution object (sample / log_prob) has no
    # Pallas equivalent here; the consumer builds it from (mean, std).
    return mean_padded, params["std"]


def init_normc(key, num_outputs, num_inputs):
    """Deterministic stand-in for init_normc_: N(0,1) rows normalized to unit norm."""
    w = jax.random.normal(key, (num_outputs, num_inputs), dtype=jnp.float32)
    w = w / jnp.sqrt(jnp.sum(w * w, axis=1, keepdims=True))
    return w


if __name__ == "__main__":
    B, NUM_INPUTS, NUM_OUTPUTS = 8, 32, 8

    key = jax.random.PRNGKey(0)
    k_x, k_w, k_ls = jax.random.split(key, 3)

    # Producer supplies bf16 activations (policy trunk output); the cast here
    # stands in for that producer — it is not part of the hot path.
    x = jax.random.normal(k_x, (B, NUM_INPUTS), dtype=jnp.float32).astype(jnp.bfloat16)

    # fc_mean: normc-initialized weight, zero bias (as in init_(self.fc_mean)).
    weight = init_normc(k_w, NUM_OUTPUTS, NUM_INPUTS)          # (Dout, Din)
    bias = jnp.zeros((NUM_OUTPUTS,), dtype=jnp.float32)
    # AddBias parameter is zeros in the module; perturb slightly so exp() is
    # exercised non-trivially but deterministically.
    logstd = 0.1 * jax.random.normal(k_ls, (NUM_OUTPUTS,), dtype=jnp.float32)

    # One-time parameter prep (transpose + lane-pad + bf16 weight, std=exp(logstd)).
    params = make_diag_gaussian_params(weight, bias, logstd)

    mean_padded, std = diag_gaussian(x, params)
    jax.block_until_ready((mean_padded, std))

    # Consumer-side compaction (fuses with downstream use in a real pipeline).
    mean = mean_padded[:, :NUM_OUTPUTS]

    # Pure-JAX reference with the same bf16-rounded inputs and f32 accumulate.
    x_f32 = x.astype(jnp.float32)
    w_f32 = weight.astype(jnp.bfloat16).astype(jnp.float32)
    ref_mean = x_f32 @ w_f32.T + bias[None, :]
    ref_std = jnp.exp(logstd)[None, :]

    assert mean_padded.shape == (B, 128) and std.shape == (1, NUM_OUTPUTS)
    assert jnp.allclose(mean, ref_mean, atol=2e-5, rtol=2e-5)
    assert jnp.allclose(std, ref_std, atol=1e-6, rtol=1e-6)
    # Lane padding beyond Dout is zero weight + zero bias -> exact zeros.
    assert jnp.allclose(mean_padded[:, NUM_OUTPUTS:], 0.0, atol=1e-6)

    print("KERNEL_OK")
</pallas_src>

<mosaic_0001>
module attributes {stable_mosaic.version = 11 : i64} {
  func.func @_linear_mean_kernel(%arg0: i32, %arg1: memref<8x32xbf16, #tpu.memory_space<vmem>>, %arg2: memref<32x128xbf16, #tpu.memory_space<vmem>>, %arg3: memref<1x128xf32, #tpu.memory_space<vmem>>, %arg4: memref<8x128xf32, #tpu.memory_space<vmem>>) attributes {dimension_semantics = [#tpu.dimension_semantics<parallel>], iteration_bounds = array<i64: 1>, scalar_prefetch = 0 : i64, scratch_operands = 0 : i64, tpu.core_type = #tpu.core_type<tc>, window_params = [{transform_indices = @transform_0, window_bounds = array<i64: 8, 32>}, {pipeline_mode = #tpu.pipeline_mode<synchronous>, transform_indices = @transform_1, window_bounds = array<i64: 32, 128>}, {pipeline_mode = #tpu.pipeline_mode<synchronous>, transform_indices = @transform_2, window_bounds = array<i64: 1, 128>}, {transform_indices = @transform_3, window_bounds = array<i64: 8, 128>}]} {
    %c0 = arith.constant 0 : index
    %c0_0 = arith.constant 0 : index
    %0 = vector.load %arg1[%c0, %c0_0] : memref<8x32xbf16, #tpu.memory_space<vmem>>, vector<8x32xbf16>
    %c0_1 = arith.constant 0 : index
    %c0_2 = arith.constant 0 : index
    %1 = vector.load %arg2[%c0_1, %c0_2] : memref<32x128xbf16, #tpu.memory_space<vmem>>, vector<32x128xbf16>
    %cst = arith.constant dense<0.000000e+00> : vector<8x128xf32>
    %2 = tpu.matmul %0, %1, %cst {dimension_numbers = #tpu.dot_dimension_numbers<[1], [0], [0], [1], [0, 0, 1, 1], [], []>} : vector<8x32xbf16>, vector<32x128xbf16>, vector<8x128xf32> -> vector<8x128xf32>
    %c0_3 = arith.constant 0 : index
    %c0_4 = arith.constant 0 : index
    %3 = vector.load %arg3[%c0_3, %c0_4] : memref<1x128xf32, #tpu.memory_space<vmem>>, vector<1x128xf32>
    %4 = vector.broadcast %3 : vector<1x128xf32> to vector<8x128xf32>
    %5 = arith.addf %2, %4 : vector<8x128xf32>
    %c0_5 = arith.constant 0 : index
    %c0_6 = arith.constant 0 : index
    %6 = vector.load %arg4[%c0_5, %c0_6] : memref<8x128xf32, #tpu.memory_space<vmem>>, vector<8x128xf32>
    tpu.vector_store %arg4[%c0_5, %c0_6], %5 {strides = array<i32>} : memref<8x128xf32, #tpu.memory_space<vmem>>, vector<8x128xf32>,
    return
  }
  func.func @transform_0(%arg0: i32) -> (i32, i32) {
    %c0_i32 = arith.constant 0 : i32
    %c0_i32_0 = arith.constant 0 : i32
    return %arg0, %c0_i32 : i32, i32
  }
  func.func @transform_1(%arg0: i32) -> (i32, i32) {
    %c0_i32 = arith.constant 0 : i32
    %c0_i32_0 = arith.constant 0 : i32
    %c0_i32_1 = arith.constant 0 : i32
    return %c0_i32, %c0_i32_0 : i32, i32
  }
  func.func @transform_2(%arg0: i32) -> (i32, i32) {
    %c0_i32 = arith.constant 0 : i32
    %c0_i32_0 = arith.constant 0 : i32
    %c0_i32_1 = arith.constant 0 : i32
    return %c0_i32, %c0_i32_0 : i32, i32
  }
  func.func @transform_3(%arg0: i32) -> (i32, i32) {
    %c0_i32 = arith.constant 0 : i32
    %c0_i32_0 = arith.constant 0 : i32
    return %arg0, %c0_i32 : i32, i32
  }
}

</mosaic_0001>

<llo_original>
// kernel: tpu_custom_call.1
$region0: #{tpu_custom_call.1}
  #allocation0 [shape = 'u32[]', space=smem, size = 0x4, offset = 0x4, fixed_abs, tag = 'smem constant byte address 0x4 - core index']
  #allocation1 [shape = 'u32[144,128]{1,0:T(1,128)}', space=vmem, size = 0x12000, scoped, tag = 'internal scratch']
  %s0 = inlined_call_operand.hbm [shape: bf16[8,32], index: 0, kind: input, shape index: {}]
  %s1 = inlined_call_operand.hbm [shape: bf16[32,128], index: 1, kind: input, shape index: {}]
  %s2 = inlined_call_operand.vmem [shape: f32[1,128], index: 2, kind: input, shape index: {}]
  %s3 = inlined_call_operand.hbm [shape: f32[8,128], index: 3, kind: output, shape index: {}]
  %s4 = sld [smem:[#allocation0]]
  $region30: #{tpu_custom_call.1} parent=0
    _
  %s6 = ssub.s32 1, %s4
  %s7 = scalar_select 0, %s6, %s4
  $region1: #{tpu_custom_call.1} parent=0
    #allocation2 [shape = 'u8[2048]{0}', space=vmem, size = 0x800, scoped, tag = 'input window, operand 0, single buffered']
    #allocation3 [shape = 's32[1]{0}', space=sflag, size = 0x4, scoped, tag = 'scoped memory for tpu_custom_call.1']
    #allocation4 [shape = 's32[1]{0}', space=sflag, size = 0x4, scoped, tag = 'scoped memory for tpu_custom_call.1']
    #allocation5 [shape = 'u8[8192]{0}', space=vmem, size = 0x2000, scoped, tag = 'input window, operand 1, single buffered']
    #allocation6 [shape = 's32[1]{0}', space=sflag, size = 0x4, scoped, tag = 'scoped memory for tpu_custom_call.1']
    #allocation7 [shape = 'u8[4096]{0}', space=vmem, size = 0x1000, scoped, tag = 'output window, operand 0, single buffered']
    %8 = vsyncpa [#allocation3], 0
    %9 = vsyncpa [#allocation6], 0
    %10 = vsyncpa [#allocation4], 0
    // Predicated region
    $region2: #{tpu_custom_call.1} parent=1 // pred_check
      _
    $region3: #{tpu_custom_call.1} parent=1 // pred_check_branch
      %12 = sbr.rel (0) target = $region5
    $region4: #{tpu_custom_call.1} parent=1 // pred_region
      %s14 = ssub.s32 64, 64
      %15 = vsyncadd [#allocation3], %s14
      %s17 = sshll.u32 [#allocation2], 4
      %s18 = int_to_ptr.vmem [resolvable:$true] %s17
      %20 = dma.hbm_to_vmem [thread:$0]  %s0, 64, %s18, [#allocation3]
    $region5: #{tpu_custom_call.1} parent=1 // pred_fallthru
      _
    // Predicated region
    $region6: #{tpu_custom_call.1} parent=1 // pred_check
      _
    $region7: #{tpu_custom_call.1} parent=1 // pred_check_branch
      %22 = sbr.rel (0) target = $region9
    $region8: #{tpu_custom_call.1} parent=1 // pred_region
      %s24 = ssub.s32 256, 256
      %25 = vsyncadd [#allocation6], %s24
      %s26 = sshll.u32 [#allocation5], 4
      %s27 = int_to_ptr.vmem [resolvable:$true] %s26
      %32 = dma.hbm_to_vmem [thread:$0]  %s1, 256, %s27, [#allocation6], 64, 64, 4
    $region9: #{tpu_custom_call.1} parent=1 // pred_fallthru
      _
    // Predicated region
    $region10: #{tpu_custom_call.1} parent=1 // pred_check
      _
    $region11: #{tpu_custom_call.1} parent=1 // pred_check_branch
      %34 = sbr.rel (0) target = $region13
    $region12: #{tpu_custom_call.1} parent=1 // pred_region
      _
    $region13: #{tpu_custom_call.1} parent=1 // pred_fallthru
      _
    // Predicated region
    $region14: #{tpu_custom_call.1} parent=1 // pred_check
      _
    $region15: #{tpu_custom_call.1} parent=1 // pred_check_branch
      %36 = sbr.rel (0) target = $region17
    $region16: #{tpu_custom_call.1} parent=1 // pred_region
      %37 = dma.done [#allocation3], 64
    $region17: #{tpu_custom_call.1} parent=1 // pred_fallthru
      _
    // Predicated region
    $region18: #{tpu_custom_call.1} parent=1 // pred_check
      _
    $region19: #{tpu_custom_call.1} parent=1 // pred_check_branch
      %39 = sbr.rel (0) target = $region21
    $region20: #{tpu_custom_call.1} parent=1 // pred_region
      %40 = dma.done [#allocation6], 256
    $region21: #{tpu_custom_call.1} parent=1 // pred_fallthru
      _
    %v42 = vld [vmem:[#allocation2] sm:$0xf]
    %v43 = vld [vmem:[#allocation5] sm:$0xf]
    %v44 = vld [vmem:[#allocation5 + $0x4] sm:$0xf]
    %v45 = vld [vmem:[#allocation5 + $0x8] sm:$0xf]
    %v46 = vld [vmem:[#allocation5 + $0xc] sm:$0xf]
    %v47 = vld [vmem:[%s2] sm:$0x1]
    %v49 = vlaneseq
    %v50 = vshrl.u32 %v49, 7
    %v51 = vsub.s32 0, %v50
    %v52 = vrot.slane %v47, %v51
    %v58 = vunpack.c.l.b16 %v43
    %v59 = vunpack.c.l.b16 %v44
    %v60 = vunpack.c.l.b16 %v45
    %v61 = vunpack.c.l.b16 %v46
    %v62 = vpack.c.b16 %v59, %v58
    %v63 = vpack.c.b16 %v61, %v60
    %vm66 = vcmask 261120
    %v68 = vsel %vm66, %v42, 0
    %70 = vmatprep.subr.bf16.mxu0 0
    %71 = vmatpush1.bf16.msra.mxu0 %v62
    %72 = vmatprep.subr.bf16.mxu0 0
    %73 = vmatpush1.bf16.msra.mxu0 %v63
    %74 = vmatprep.subr.bf16.mxu0 0
    %75 = vmatpush1.bf16.msra.mxu0 0
    %76 = vmatprep.subr.bf16.mxu0 0
    %77 = vmatpush1.bf16.msra.mxu0 0
    %78 = vmatprep.subr.bf16.mxu0 0
    %79 = vmatpush1.bf16.msra.mxu0 0
    %80 = vmatprep.subr.bf16.mxu0 0
    %81 = vmatpush1.bf16.msra.mxu0 0
    %82 = vmatprep.subr.bf16.mxu0 0
    %83 = vmatpush1.bf16.msra.mxu0 0
    %84 = vmatprep.subr.bf16.mxu0 0
    %85 = vmatpush1.bf16.msra.mxu0 0
    %86 = vmatprep.subr.bf16.mxu0 0
    %87 = vmatpush1.bf16.msra.mxu0 0
    %88 = vmatprep.subr.bf16.mxu0 0
    %89 = vmatpush1.bf16.msra.mxu0 0
    %90 = vmatprep.subr.bf16.mxu0 0
    %91 = vmatpush1.bf16.msra.mxu0 0
    %92 = vmatprep.subr.bf16.mxu0 0
    %93 = vmatpush1.bf16.msra.mxu0 0
    %94 = vmatprep.subr.bf16.mxu0 0
    %95 = vmatpush1.bf16.msra.mxu0 0
    %96 = vmatprep.subr.bf16.mxu0 0
    %97 = vmatpush1.bf16.msra.mxu0 0
    %98 = vmatprep.subr.bf16.mxu0 0
    %99 = vmatpush1.bf16.msra.mxu0 0
    %100 = vmatprep.subr.bf16.mxu0 0
    %101 = vmatpush1.bf16.msra.mxu0 0
    %102 = vmatprep.mubr.bf16.mxu0 0
    %103 = vmatmul.mubr.bf16.gmra.mrb[0].mxu0 %v68
    %v104 = vpop.f32.mrb[0].mxu0
    %v105 = vadd.f32 %v52, %v104
    %v106 = vpop.f32.mrb[0].mxu0
    %v107 = vpop.f32.mrb[0].mxu0
    %v108 = vpop.f32.mrb[0].mxu0
    %109 = vdwg.mxu0
    %110 = vst [vmem:[#allocation7] sm:$0xff] %v105
    // Predicated region
    $region22: #{tpu_custom_call.1} parent=1 // pred_check
      _
    $region23: #{tpu_custom_call.1} parent=1 // pred_check_branch
      %112 = sbr.rel (0) target = $region25
    $region24: #{tpu_custom_call.1} parent=1 // pred_region
      %s114 = ssub.s32 128, 128
      %115 = vsyncadd [#allocation4], %s114
      %s117 = sshll.u32 [#allocation7], 4
      %s118 = int_to_ptr.vmem [resolvable:$true] %s117
      %120 = dma.vmem_to_hbm [thread:$0]  %s118, 128, %s3, [#allocation4]
    $region25: #{tpu_custom_call.1} parent=1 // pred_fallthru
      _
    // Predicated region
    $region26: #{tpu_custom_call.1} parent=1 // pred_check
      _
    $region27: #{tpu_custom_call.1} parent=1 // pred_check_branch
      %122 = sbr.rel (0) target = $region29
    $region28: #{tpu_custom_call.1} parent=1 // pred_region
      %123 = dma.done [#allocation4], 128
    $region29: #{tpu_custom_call.1} parent=1 // pred_fallthru
      _
    %124 = vsyncpa [#allocation3], 1
    %125 = vsyncpa [#allocation6], 1
    %126 = vsyncpa [#allocation4], 1

</llo_original>
